<compile_context>
chip_gen: v6e
topology: v6e:2x2x1
jax: 0.10.0
libtpu: 0.0.40
codegen_flags: <defaults>
</compile_context>

<pallas_src>
import functools

import jax
import jax.numpy as jnp
from jax.experimental import pallas as pl
from jax.experimental.pallas import tpu as pltpu


def _bs_mv_alpha_clip_kernel(in_ref, o_ref, *, xi, sigma, r, Wstar):
    # in_ref: (2, TR, C) float32; channel 0 = time_to_maturity, 1 = wealth.
    ttm = in_ref[0]        # (TR, C), samples lane-dense on last axis
    wealth = in_ref[1]     # (TR, C)

    # alpha = xi / sigma / wealth * (Wstar * exp(-r * ttm) - wealth)
    coeff = xi / sigma     # trace-time Python constant
    alpha = coeff / wealth * (Wstar * jnp.exp(-r * ttm) - wealth)

    # Exact PyTorch mask-multiply clip semantics.
    alpha = alpha * (alpha > 0.0).astype(alpha.dtype)
    alpha_clip = (alpha * (alpha < 1.0).astype(alpha.dtype)
                  + (alpha >= 1.0).astype(alpha.dtype))

    # Direct channel stores (no lane-axis concat): lane-dense unmasked vst.
    o_ref[0] = alpha_clip
    o_ref[1] = 1.0 - alpha_clip


@functools.partial(
    jax.jit,
    static_argnames=("mu", "sigma", "r", "Wstar", "lane_tile", "row_tile",
                     "channel_major"))
def blackscholes_mv_alpha_clip(x, *, mu, sigma, r, Wstar,
                               lane_tile=1024, row_tile=512,
                               channel_major=False):
    """Pallas implementation of BlackScholesMeanVarianceAlphaClip.forward.

    Returns an (N, 2) float32 array (N = prod(leading dims of x)), or a
    (2, N) channel-major array if channel_major=True.
    """
    xi = (mu - r) / sigma                      # module's self.xi
    F = x.shape[-1]
    x2 = x.reshape(-1, F).astype(jnp.float32)  # torch .view(-1, 1) flattens
    N = x2.shape[0]

    # Lane-dense packing: sample index n -> (n // C, n % C), C multiple of 128.
    C = min(lane_tile, pl.cdiv(N, 128) * 128)  # lane width
    R = pl.cdiv(N, C)                          # rows of samples
    # Sublane tile: multiple of 8, <= row_tile, and small enough that the
    # parallel grid has >= 2 steps whenever R >= 16 (engages both v7x TCs).
    TR = min(row_tile, max(8, 8 * pl.cdiv(R, 16)))
    R_pad = pl.cdiv(R, TR) * TR
    total = R_pad * C
    pad = total - N

    # Single fused pre-pass (under jit): select the two used columns, stack
    # channel-major, pad the tail with 1.0 (finite for both ttm and wealth),
    # and reshape lane-dense.  Padded samples are sliced away below.
    stacked = jnp.stack([x2[:, 1], x2[:, -1]], axis=0)          # (2, N)
    stacked = jnp.pad(stacked, ((0, 0), (0, pad)), constant_values=1.0)
    stacked = stacked.reshape(2, R_pad, C)

    kernel = functools.partial(
        _bs_mv_alpha_clip_kernel, xi=xi, sigma=sigma, r=r, Wstar=Wstar)

    out = pl.pallas_call(
        kernel,
        out_shape=jax.ShapeDtypeStruct((2, R_pad, C), jnp.float32),
        grid=(R_pad // TR,),
        in_specs=[
            pl.BlockSpec((2, TR, C), lambda i: (0, i, 0)),
        ],
        out_specs=pl.BlockSpec((2, TR, C), lambda i: (0, i, 0)),
        compiler_params=pltpu.CompilerParams(
            dimension_semantics=("parallel",),
            vmem_limit_bytes=48 << 20),
        cost_estimate=pl.CostEstimate(
            flops=10 * N, transcendentals=N, bytes_accessed=16 * N),
    )(stacked)

    # Fused post-pass (under jit) back to the module's layout.
    out_flat = out.reshape(2, total)[:, :N]     # (2, N)
    if channel_major:
        return out_flat
    return out_flat.T                           # (N, 2): [alpha_clip, 1-alpha_clip]


def _reference(x, *, mu, sigma, r, Wstar):
    """Pure-JAX reference mirroring the PyTorch module exactly."""
    xi = (mu - r) / sigma
    wealth = x[..., -1]
    ttm = x[..., 1]
    alpha = xi / sigma / wealth * (Wstar * jnp.exp(-r * ttm) - wealth)
    alpha = alpha.reshape(-1, 1)
    alpha = alpha * (alpha > 0)
    alpha_clip = alpha * (alpha < 1) + (alpha >= 1)
    return jnp.concatenate([alpha_clip, 1.0 - alpha_clip], axis=-1)


if __name__ == "__main__":
    # Module constructor params (deterministic, synthetic).
    mu, sigma, r, Wstar = 0.08, 0.2, 0.02, 1.5

    # Input: (batch=2, seq=8, features=3) -> [price, time_to_maturity, wealth]
    key = jax.random.PRNGKey(0)
    k1, k2, k3 = jax.random.split(key, 3)
    price = jax.random.uniform(k1, (2, 8, 1), minval=0.8, maxval=1.2)
    ttm = jax.random.uniform(k2, (2, 8, 1), minval=0.0, maxval=1.0)
    wealth = jax.random.uniform(k3, (2, 8, 1), minval=0.5, maxval=2.0)
    x = jnp.concatenate([price, ttm, wealth], axis=-1).astype(jnp.float32)

    out = blackscholes_mv_alpha_clip(x, mu=mu, sigma=sigma, r=r, Wstar=Wstar)
    out = jax.block_until_ready(out)

    ref = _reference(x, mu=mu, sigma=sigma, r=r, Wstar=Wstar)
    assert out.shape == (16, 2), out.shape
    assert jnp.allclose(out, ref, atol=1e-5, rtol=1e-5), (out, ref)

    # Also exercise a larger, multi-tile case to cover the multi-step grid path.
    kb = jax.random.split(jax.random.PRNGKey(1), 3)
    xb = jnp.concatenate([
        jax.random.uniform(kb[0], (4, 3000, 1), minval=0.8, maxval=1.2),
        jax.random.uniform(kb[1], (4, 3000, 1), minval=0.0, maxval=1.0),
        jax.random.uniform(kb[2], (4, 3000, 1), minval=0.5, maxval=2.0),
    ], axis=-1).astype(jnp.float32)
    outb = jax.block_until_ready(
        blackscholes_mv_alpha_clip(xb, mu=mu, sigma=sigma, r=r, Wstar=Wstar))
    refb = _reference(xb, mu=mu, sigma=sigma, r=r, Wstar=Wstar)
    assert outb.shape == (12000, 2), outb.shape
    assert jnp.allclose(outb, refb, atol=1e-5, rtol=1e-5)

    # Channel-major fast path (skips the final transpose).
    outc = jax.block_until_ready(
        blackscholes_mv_alpha_clip(xb, mu=mu, sigma=sigma, r=r, Wstar=Wstar,
                                   channel_major=True))
    assert outc.shape == (2, 12000), outc.shape
    assert jnp.allclose(outc.T, refb, atol=1e-5, rtol=1e-5)

    print("KERNEL_OK")
</pallas_src>

<mosaic_0001>
module attributes {stable_mosaic.version = 11 : i64} {
  func.func @_bs_mv_alpha_clip_kernel(%arg0: i32, %arg1: memref<2x8x128xf32, #tpu.memory_space<vmem>>, %arg2: memref<2x8x128xf32, #tpu.memory_space<vmem>>) attributes {dimension_semantics = [#tpu.dimension_semantics<parallel>], iteration_bounds = array<i64: 1>, scalar_prefetch = 0 : i64, scratch_operands = 0 : i64, tpu.core_type = #tpu.core_type<tc>, window_params = [{transform_indices = @transform_0, window_bounds = array<i64: 2, 8, 128>}, {transform_indices = @transform_1, window_bounds = array<i64: 2, 8, 128>}]} {
    %c0 = arith.constant 0 : index
    %c0_0 = arith.constant 0 : index
    %c0_1 = arith.constant 0 : index
    %0 = vector.load %arg1[%c0, %c0_0, %c0_1] : memref<2x8x128xf32, #tpu.memory_space<vmem>>, vector<1x8x128xf32>
    %1 = vector.shape_cast %0 : vector<1x8x128xf32> to vector<8x128xf32>
    %c1 = arith.constant 1 : index
    %c0_2 = arith.constant 0 : index
    %c0_3 = arith.constant 0 : index
    %2 = vector.load %arg1[%c1, %c0_2, %c0_3] : memref<2x8x128xf32, #tpu.memory_space<vmem>>, vector<1x8x128xf32>
    %3 = vector.shape_cast %2 : vector<1x8x128xf32> to vector<8x128xf32>
    %cst = arith.constant 1.500000e+00 : f32
    %4 = vector.broadcast %cst : f32 to vector<8x128xf32>
    %5 = arith.divf %4, %3 : vector<8x128xf32>
    %cst_4 = arith.constant -2.000000e-02 : f32
    %6 = vector.broadcast %cst_4 : f32 to vector<8x128xf32>
    %7 = arith.mulf %6, %1 : vector<8x128xf32>
    %8 = math.exp %7 : vector<8x128xf32>
    %cst_5 = arith.constant 1.500000e+00 : f32
    %9 = vector.broadcast %cst_5 : f32 to vector<8x128xf32>
    %10 = arith.mulf %9, %8 : vector<8x128xf32>
    %11 = arith.subf %10, %3 : vector<8x128xf32>
    %12 = arith.mulf %5, %11 : vector<8x128xf32>
    %cst_6 = arith.constant 0.000000e+00 : f32
    %13 = vector.broadcast %cst_6 : f32 to vector<8x128xf32>
    %14 = arith.cmpf ogt, %12, %13 : vector<8x128xf32>
    %15 = arith.extui %14 : vector<8x128xi1> to vector<8x128xi32>
    %16 = arith.sitofp %15 : vector<8x128xi32> to vector<8x128xf32>
    %17 = arith.mulf %12, %16 : vector<8x128xf32>
    %cst_7 = arith.constant 1.000000e+00 : f32
    %18 = vector.broadcast %cst_7 : f32 to vector<8x128xf32>
    %19 = arith.cmpf olt, %17, %18 : vector<8x128xf32>
    %20 = arith.extui %19 : vector<8x128xi1> to vector<8x128xi32>
    %21 = arith.sitofp %20 : vector<8x128xi32> to vector<8x128xf32>
    %22 = arith.mulf %17, %21 : vector<8x128xf32>
    %cst_8 = arith.constant 1.000000e+00 : f32
    %23 = vector.broadcast %cst_8 : f32 to vector<8x128xf32>
    %24 = arith.cmpf oge, %17, %23 : vector<8x128xf32>
    %25 = arith.extui %24 : vector<8x128xi1> to vector<8x128xi32>
    %26 = arith.sitofp %25 : vector<8x128xi32> to vector<8x128xf32>
    %27 = arith.addf %22, %26 : vector<8x128xf32>
    %c0_9 = arith.constant 0 : index
    %c0_10 = arith.constant 0 : index
    %c0_11 = arith.constant 0 : index
    %28 = vector.load %arg2[%c0_9, %c0_10, %c0_11] : memref<2x8x128xf32, #tpu.memory_space<vmem>>, vector<1x8x128xf32>
    %29 = vector.shape_cast %28 : vector<1x8x128xf32> to vector<8x128xf32>
    %30 = vector.shape_cast %27 : vector<8x128xf32> to vector<1x8x128xf32>
    tpu.vector_store %arg2[%c0_9, %c0_10, %c0_11], %30 {strides = array<i32>} : memref<2x8x128xf32, #tpu.memory_space<vmem>>, vector<1x8x128xf32>,
    %cst_12 = arith.constant 1.000000e+00 : f32
    %31 = vector.broadcast %cst_12 : f32 to vector<8x128xf32>
    %32 = arith.subf %31, %27 : vector<8x128xf32>
    %c1_13 = arith.constant 1 : index
    %c0_14 = arith.constant 0 : index
    %c0_15 = arith.constant 0 : index
    %33 = vector.load %arg2[%c1_13, %c0_14, %c0_15] : memref<2x8x128xf32, #tpu.memory_space<vmem>>, vector<1x8x128xf32>
    %34 = vector.shape_cast %33 : vector<1x8x128xf32> to vector<8x128xf32>
    %35 = vector.shape_cast %32 : vector<8x128xf32> to vector<1x8x128xf32>
    tpu.vector_store %arg2[%c1_13, %c0_14, %c0_15], %35 {strides = array<i32>} : memref<2x8x128xf32, #tpu.memory_space<vmem>>, vector<1x8x128xf32>,
    return
  }
  func.func @transform_0(%arg0: i32) -> (i32, i32, i32) {
    %c0_i32 = arith.constant 0 : i32
    %c0_i32_0 = arith.constant 0 : i32
    %c0_i32_1 = arith.constant 0 : i32
    return %c0_i32, %arg0, %c0_i32_0 : i32, i32, i32
  }
  func.func @transform_1(%arg0: i32) -> (i32, i32, i32) {
    %c0_i32 = arith.constant 0 : i32
    %c0_i32_0 = arith.constant 0 : i32
    %c0_i32_1 = arith.constant 0 : i32
    return %c0_i32, %arg0, %c0_i32_0 : i32, i32, i32
  }
}

</mosaic_0001>

<llo_original>
// kernel: blackscholes_mv_alpha_clip.1
$region0: #{blackscholes_mv_alpha_clip.1}
  #allocation0 [shape = 'u32[]', space=smem, size = 0x4, offset = 0x4, fixed_abs, tag = 'smem constant byte address 0x4 - core index']
  #allocation1 [shape = 'u32[144,128]{1,0:T(1,128)}', space=vmem, size = 0x12000, scoped, tag = 'internal scratch']
  %s0 = inlined_call_operand.vmem [shape: f32[2,8,128], index: 0, kind: input, shape index: {}]
  %s1 = inlined_call_operand.vmem [shape: f32[2,8,128], index: 1, kind: output, shape index: {}]
  %s2 = sld [smem:[#allocation0]]
  $region14: #{blackscholes_mv_alpha_clip.1} parent=0
    _
  %s4 = ssub.s32 1, %s2
  %s5 = scalar_select 0, %s4, %s2
  // Predicated region
  $region2: #{blackscholes_mv_alpha_clip.1} parent=0 // pred_check
    _
  $region3: #{blackscholes_mv_alpha_clip.1} parent=0 // pred_check_branch
    %7 = sbr.rel (0) target = $region5
  $region4: #{blackscholes_mv_alpha_clip.1} parent=0 // pred_region
    _
  $region5: #{blackscholes_mv_alpha_clip.1} parent=0 // pred_fallthru
    _
  %v8 = vld [vmem:[%s0] sm:$0xff]
  %s9 = scalar_lea.vmem %s0, 8
  %v10 = vld [vmem:[%s9] sm:$0xff]
  %v11 = vrcp.pop %v10
  %v12 = vmul.f32 1.5, %v11
  %v13 = vmul.f32 %v8, -0.02
  %v14 = vmul.f32 %v13, 1.442695
  %v15 = vpow.pop %v14
  %v16 = vmul.f32 %v15, 1.5
  %v17 = vsub.f32 %v16, %v10
  %v18 = vmul.f32 %v12, %v17
  %vm19 = vcmp.gt.f32.partialorder %v18, 0.0
  %v20 = vsel %vm19, 1, 0
  %v21 = vcvt.s32.f32 %v20
  %v22 = vmul.f32 %v18, %v21
  %vm23 = vcmp.lt.f32.partialorder %v22, 1.0
  %v24 = vsel %vm23, 1, 0
  %v25 = vcvt.s32.f32 %v24
  %v26 = vmul.f32 %v22, %v25
  %vm27 = vcmp.ge.f32.partialorder %v22, 1.0
  %v28 = vsel %vm27, 1, 0
  %v29 = vcvt.s32.f32 %v28
  %v30 = vadd.f32 %v26, %v29
  %31 = vst [vmem:[%s1] sm:$0xff] %v30
  %v32 = vsub.f32 1.0, %v30
  %s33 = scalar_lea.vmem %s1, 8
  %34 = vst [vmem:[%s33] sm:$0xff] %v32
  // Predicated region
  $region6: #{blackscholes_mv_alpha_clip.1} parent=0 // pred_check
    _
  $region7: #{blackscholes_mv_alpha_clip.1} parent=0 // pred_check_branch
    %36 = sbr.rel (0) target = $region9
  $region8: #{blackscholes_mv_alpha_clip.1} parent=0 // pred_region
    _
  $region9: #{blackscholes_mv_alpha_clip.1} parent=0 // pred_fallthru
    _
  // Predicated region
  $region10: #{blackscholes_mv_alpha_clip.1} parent=0 // pred_check
    _
  $region11: #{blackscholes_mv_alpha_clip.1} parent=0 // pred_check_branch
    %38 = sbr.rel (0) target = $region13
  $region12: #{blackscholes_mv_alpha_clip.1} parent=0 // pred_region
    _
  $region13: #{blackscholes_mv_alpha_clip.1} parent=0 // pred_fallthru
    _

</llo_original>
